<compile_context>
chip_gen: v5e
topology: v5e:2x2
jax: 0.10.0
libtpu: 0.0.40
codegen_flags: <defaults>
</compile_context>

<pallas_src>
import jax
import jax.numpy as jnp
from jax.experimental import pallas as pl
from jax.experimental.pallas import tpu as pltpu


# ----------------------------------------------------------------------------
# Kernel body: one MXU matmul per (batch, spatial-tile) grid step.
# ----------------------------------------------------------------------------
def _conv1x1_kernel(w_ref, b_ref, x_ref, o_ref):
    # w_ref: (K, C)   b_ref: (K, 1) f32   x_ref: (C, T)   o_ref: (K, T)
    acc = jnp.dot(w_ref[...], x_ref[...], preferred_element_type=jnp.float32)
    o_ref[...] = (acc + b_ref[...]).astype(o_ref.dtype)


# ----------------------------------------------------------------------------
# Tiling / VMEM helpers.
# ----------------------------------------------------------------------------
_MAX_TILE_HW = 16384  # lanes; amortizes ~0.35us/step overhead without huge steps


def _round_down(x, m):
    return (x // m) * m


def _vmem_capacity_bytes():
    """Per-core VMEM capacity; conservative fallback works on every generation."""
    try:
        return int(pltpu.get_tpu_info().vmem_capacity_bytes)
    except Exception:
        return 64 * 1024 * 1024  # v7x per-TC size; safe lower bound for v5e/v6e


def _pick_tile_hw(hw, c, k, in_itemsize, out_itemsize, n):
    """Spatial (lane-axis) tile size.

    No divisibility requirement on H*W: the grid uses cdiv and Pallas masks
    the partial last block, so we just take the largest multiple of 128 that
    (a) is <= H*W and (b) fits the generation-aware VMEM budget.
    """
    if hw <= 128:
        return hw  # single full-extent lane block (exempt from the 128 rule)

    cap = _vmem_capacity_bytes()
    budget = int(0.60 * cap)  # leave headroom for compiler scratch + out buffers

    c_pad = max(8, -(-c // 8) * 8)
    k_pad = max(8, -(-k // 8) * 8)
    # Double-buffered streaming input tile + double-buffered output tile.
    bytes_per_lane = 2 * c_pad * in_itemsize + 2 * k_pad * out_itemsize
    # Resident weight + bias (fetched once; constant index_map).
    resident = k_pad * c_pad * in_itemsize + k_pad * 128 * 4

    tile = _round_down(max(128, (budget - resident) // bytes_per_lane), 128)
    tile = max(128, min(tile, _MAX_TILE_HW, _round_down(hw, 128)))

    # v7x megacore: keep >= 2 parallel grid steps so both TensorCores get work
    # (a single-step grid would idle one TC; v5e/v6e are unaffected).
    while n * pl.cdiv(hw, tile) < 2 and tile > 128:
        tile = max(128, _round_down(tile // 2, 128))
    return tile


# ----------------------------------------------------------------------------
# conv_seg (1x1 conv) wrapper.
# ----------------------------------------------------------------------------
def conv_seg_pallas(x_nchw, weight, bias, *, compute_dtype=None):
    """1x1 conv (conv_seg) over an NCHW tensor via a Pallas matmul kernel.

    Computes out[n, :, p] = weight @ x[n, :, p] + bias directly in NCHW layout
    (no transposes).  The flattened spatial axis H*W is the lane axis of both
    the input and output blocks (lane-dense unmasked stores except on the
    ragged last tile, which Pallas masks automatically).

    x_nchw        : (N, C, H, W)
    weight        : (K, C)   (nn.Conv2d weight squeezed from (K, C, 1, 1))
    bias          : (K,)
    compute_dtype : optional dtype (e.g. jnp.bfloat16) to stream x / W in;
                    accumulation stays f32, output keeps x's original dtype.
    returns       : (N, K, H, W)
    """
    n, c, h, w = x_nchw.shape
    k = weight.shape[0]
    hw = h * w
    out_dtype = x_nchw.dtype

    if compute_dtype is not None:
        x_nchw = x_nchw.astype(compute_dtype)
        weight = weight.astype(compute_dtype)
    else:
        weight = weight.astype(x_nchw.dtype)

    in_itemsize = jnp.dtype(x_nchw.dtype).itemsize
    out_itemsize = jnp.dtype(out_dtype).itemsize

    tile_hw = _pick_tile_hw(hw, c, k, in_itemsize, out_itemsize, n)
    num_sp = pl.cdiv(hw, tile_hw)
    grid = (n, num_sp)

    # Contiguous reshape, no data movement; NO HBM-side pad or output slice.
    x_flat = x_nchw.reshape(n, c, hw)
    b_col = bias.reshape(k, 1).astype(jnp.float32)

    cost = pl.CostEstimate(
        flops=2 * n * hw * c * k,
        transcendentals=0,
        bytes_accessed=(n * hw * c * in_itemsize
                        + n * hw * k * out_itemsize
                        + k * c * in_itemsize + k * 4),
    )

    cap = _vmem_capacity_bytes()
    # <= 48 MiB on v7x (64 MiB physical), up to 96 MiB on v5e/v6e (128 MiB).
    vmem_limit = min(int(0.75 * cap), 96 * 1024 * 1024)

    out = pl.pallas_call(
        _conv1x1_kernel,
        out_shape=jax.ShapeDtypeStruct((n, k, hw), out_dtype),
        grid_spec=pltpu.PrefetchScalarGridSpec(
            num_scalar_prefetch=0,
            grid=grid,
            in_specs=[
                pl.BlockSpec((k, c), lambda ni, j: (0, 0)),   # weight (resident)
                pl.BlockSpec((k, 1), lambda ni, j: (0, 0)),   # bias   (resident)
                pl.BlockSpec((None, c, tile_hw), lambda ni, j: (ni, 0, j)),  # x tile
            ],
            out_specs=pl.BlockSpec((None, k, tile_hw), lambda ni, j: (ni, 0, j)),
        ),
        compiler_params=pltpu.CompilerParams(
            dimension_semantics=("parallel", "parallel"),
            vmem_limit_bytes=vmem_limit,
        ),
        cost_estimate=cost,
    )(weight, b_col, x_flat)

    return out.reshape(n, k, h, w)


# ----------------------------------------------------------------------------
# Module port.
# ----------------------------------------------------------------------------
class BaseSegmentationHeadPallas:
    """JAX/Pallas port of BaseSegmentationHead's forward-relevant pieces."""

    def __init__(self, in_channels, channels, num_classes,
                 dropout_ratio=0.1, in_index=-1, input_transform=None,
                 align_corners=False, compute_dtype=None, key=None):
        if input_transform is not None and not isinstance(in_index, list):
            raise TypeError(f'"in_index" expects a list, but got {type(in_index)}')
        self.channels = channels
        self.num_classes = num_classes
        self.in_index = in_index
        self.input_transform = input_transform
        self.dropout_ratio = dropout_ratio
        self.align_corners = align_corners
        self.compute_dtype = compute_dtype  # e.g. jnp.bfloat16 to halve HBM read
        if input_transform == "resize_concat":
            self.in_channels = sum(in_channels)
        else:
            self.in_channels = in_channels

        # Deterministic parameter init for conv_seg: Conv2d(channels, num_classes, k=1)
        key = jax.random.PRNGKey(42) if key is None else key
        kw, kb = jax.random.split(key)
        fan_in = channels  # kernel_size=1
        bound = 1.0 / jnp.sqrt(fan_in)
        self.conv_seg_weight = jax.random.uniform(
            kw, (num_classes, channels), jnp.float32, -bound, bound)
        self.conv_seg_bias = jax.random.uniform(
            kb, (num_classes,), jnp.float32, -bound, bound)

    def _transform_inputs(self, inputs):
        # TODO(synk): 'resize_concat' bilinear-resize path not implemented
        # (only the default integer in_index selection is exercised here).
        if self.input_transform == "multiple_select" and isinstance(self.in_index, list):
            return [inputs[i] for i in self.in_index]
        if isinstance(self.in_index, int):
            return inputs[self.in_index]
        raise ValueError(f"Unsupported input_transform type: {self.input_transform}")

    def cls_seg(self, feat):
        # Dropout2d is identity in eval/inference mode.
        return conv_seg_pallas(feat, self.conv_seg_weight, self.conv_seg_bias,
                               compute_dtype=self.compute_dtype)

    def forward(self, inputs):
        # BaseSegmentationHead.forward is abstract; the canonical concrete
        # flow is: select input -> (subclass feature fusion) -> cls_seg.
        feat = self._transform_inputs(inputs)
        return self.cls_seg(feat)


if __name__ == "__main__":
    key = jax.random.PRNGKey(0)
    kf1, kf2, kf3 = jax.random.split(key, 3)

    N, C_feat, num_classes = 2, 32, 4

    head = BaseSegmentationHeadPallas(
        in_channels=C_feat, channels=C_feat, num_classes=num_classes,
        dropout_ratio=0.1, in_index=-1, input_transform=None,
    )

    def ref_conv(x):
        # 1x1 conv == einsum over the channel axis.
        return (jnp.einsum("nchw,kc->nkhw", x, head.conv_seg_weight)
                + head.conv_seg_bias[None, :, None, None])

    # Case 1: aligned spatial size (H*W multiple of 128); multi-level input,
    # default in_index=-1 selects the last feature map.
    feats = [
        jax.random.normal(kf1, (N, C_feat, 8, 8), jnp.float32),
        jax.random.normal(kf2, (N, C_feat, 16, 16), jnp.float32),
    ]
    out = jax.block_until_ready(head.forward(feats))
    assert out.shape == (N, num_classes, 16, 16), out.shape
    assert jnp.allclose(out, ref_conv(feats[-1]), atol=1e-5, rtol=1e-5)

    # Case 2: H*W < 128 -> single full-extent lane block.
    x_small = jax.random.normal(kf3, (N, C_feat, 10, 10), jnp.float32)
    out_small = jax.block_until_ready(head.cls_seg(x_small))
    assert out_small.shape == (N, num_classes, 10, 10)
    assert jnp.allclose(out_small, ref_conv(x_small), atol=1e-5, rtol=1e-5)

    # Case 3: ragged H*W (400, not a multiple of 128) -> cdiv grid with a
    # masked partial last tile; no HBM-side pad or output slice.
    x_ragged = jax.random.normal(kf1, (N, C_feat, 20, 20), jnp.float32)
    out_ragged = jax.block_until_ready(head.cls_seg(x_ragged))
    assert out_ragged.shape == (N, num_classes, 20, 20)
    assert jnp.allclose(out_ragged, ref_conv(x_ragged), atol=1e-5, rtol=1e-5)

    print("KERNEL_OK")
</pallas_src>

<mosaic_0001>
module attributes {stable_mosaic.version = 11 : i64} {
  func.func @_conv1x1_kernel(%arg0: i32, %arg1: i32, %arg2: memref<4x32xf32, #tpu.memory_space<vmem>>, %arg3: memref<4x1xf32, #tpu.memory_space<vmem>>, %arg4: memref<1x32x256xf32, #tpu.memory_space<vmem>>, %arg5: memref<1x4x256xf32, #tpu.memory_space<vmem>>) attributes {dimension_semantics = [#tpu.dimension_semantics<parallel>, #tpu.dimension_semantics<parallel>], iteration_bounds = array<i64: 2, 1>, scalar_prefetch = 0 : i64, scratch_operands = 0 : i64, tpu.core_type = #tpu.core_type<tc>, window_params = [{pipeline_mode = #tpu.pipeline_mode<synchronous>, transform_indices = @transform_0, window_bounds = array<i64: 4, 32>}, {pipeline_mode = #tpu.pipeline_mode<synchronous>, transform_indices = @transform_1, window_bounds = array<i64: 4, 1>}, {transform_indices = @transform_2, window_bounds = array<i64: 1, 32, 256>}, {transform_indices = @transform_3, window_bounds = array<i64: 1, 4, 256>}]} {
    %c0 = arith.constant 0 : index
    %c0_0 = arith.constant 0 : index
    %0 = vector.load %arg2[%c0, %c0_0] : memref<4x32xf32, #tpu.memory_space<vmem>>, vector<4x32xf32>
    %c0_1 = arith.constant 0 : index
    %c0_2 = arith.constant 0 : index
    %c0_3 = arith.constant 0 : index
    %1 = vector.load %arg4[%c0_1, %c0_2, %c0_3] : memref<1x32x256xf32, #tpu.memory_space<vmem>>, vector<1x32x256xf32>
    %2 = vector.shape_cast %1 : vector<1x32x256xf32> to vector<32x256xf32>
    %cst = arith.constant dense<0.000000e+00> : vector<4x256xf32>
    %3 = tpu.matmul %0, %2, %cst {dimension_numbers = #tpu.dot_dimension_numbers<[1], [0], [0], [1], [0, 0, 1, 1], [], []>} : vector<4x32xf32>, vector<32x256xf32>, vector<4x256xf32> -> vector<4x256xf32>
    %c0_4 = arith.constant 0 : index
    %c0_5 = arith.constant 0 : index
    %4 = vector.load %arg3[%c0_4, %c0_5] : memref<4x1xf32, #tpu.memory_space<vmem>>, vector<4x1xf32>
    %5 = vector.broadcast %4 : vector<4x1xf32> to vector<4x256xf32>
    %6 = arith.addf %3, %5 : vector<4x256xf32>
    %c0_6 = arith.constant 0 : index
    %c0_7 = arith.constant 0 : index
    %c0_8 = arith.constant 0 : index
    %7 = vector.load %arg5[%c0_6, %c0_7, %c0_8] : memref<1x4x256xf32, #tpu.memory_space<vmem>>, vector<1x4x256xf32>
    %8 = vector.shape_cast %7 : vector<1x4x256xf32> to vector<4x256xf32>
    %9 = vector.shape_cast %6 : vector<4x256xf32> to vector<1x4x256xf32>
    tpu.vector_store %arg5[%c0_6, %c0_7, %c0_8], %9 {strides = array<i32>} : memref<1x4x256xf32, #tpu.memory_space<vmem>>, vector<1x4x256xf32>,
    return
  }
  func.func @transform_0(%arg0: i32, %arg1: i32) -> (i32, i32) {
    %c0_i32 = arith.constant 0 : i32
    %c0_i32_0 = arith.constant 0 : i32
    %c0_i32_1 = arith.constant 0 : i32
    return %c0_i32, %c0_i32_0 : i32, i32
  }
  func.func @transform_1(%arg0: i32, %arg1: i32) -> (i32, i32) {
    %c0_i32 = arith.constant 0 : i32
    %c0_i32_0 = arith.constant 0 : i32
    %c0_i32_1 = arith.constant 0 : i32
    return %c0_i32, %c0_i32_0 : i32, i32
  }
  func.func @transform_2(%arg0: i32, %arg1: i32) -> (i32, i32, i32) {
    %c0_i32 = arith.constant 0 : i32
    %c0_i32_0 = arith.constant 0 : i32
    return %arg0, %c0_i32, %arg1 : i32, i32, i32
  }
  func.func @transform_3(%arg0: i32, %arg1: i32) -> (i32, i32, i32) {
    %c0_i32 = arith.constant 0 : i32
    %c0_i32_0 = arith.constant 0 : i32
    return %arg0, %c0_i32, %arg1 : i32, i32, i32
  }
}

</mosaic_0001>

<llo_original>
// kernel: tpu_custom_call.1
$region0: #{tpu_custom_call.1}
  #allocation0 [shape = 'u32[]', space=smem, size = 0x4, offset = 0x4, fixed_abs, tag = 'smem constant byte address 0x4 - core index']
  #allocation1 [shape = 'u32[72,128]{1,0:T(1,128)}', space=vmem, size = 0x9000, scoped, tag = 'internal scratch']
  %s0 = inlined_call_operand.vmem [shape: f32[4,32], index: 0, kind: input, shape index: {}]
  %s1 = inlined_call_operand.vmem [shape: f32[4,1], index: 1, kind: input, shape index: {}]
  %s2 = inlined_call_operand.hbm [shape: f32[2,32,256], index: 2, kind: input, shape index: {}]
  %s3 = inlined_call_operand.hbm [shape: f32[2,4,256], index: 3, kind: output, shape index: {}]
  %s4 = sld [smem:[#allocation0]]
  $region49: #{tpu_custom_call.1} parent=0
    _
  %s6 = ssub.s32 1, %s4
  %s7 = scalar_select 0, %s6, %s4
  $region1: #{tpu_custom_call.1} parent=0
    #allocation2 [shape = 'u8[65536]{0}', space=vmem, size = 0x10000, scoped, tag = 'input window, operand 2']
    #allocation3 [shape = 's32[2]{0}', space=sflag, size = 0x8, scoped, tag = 'scoped memory for tpu_custom_call.1']
    #allocation4 [shape = 's32[2]{0}', space=sflag, size = 0x8, scoped, tag = 'scoped memory for tpu_custom_call.1']
    #allocation5 [shape = 'u8[8192]{0}', space=vmem, size = 0x2000, scoped, tag = 'output window, operand 0']
    %8 = vsyncpa [#allocation3], 0
    %s9 = scalar_lea.sflag [#allocation3], 1
    %10 = vsyncpa %s9, 0
    %11 = vsyncpa [#allocation4], 0
    %s12 = scalar_lea.sflag [#allocation4], 1
    %13 = vsyncpa %s12, 0
    loop: start=0, step=1, limit=4
    $region2: #{tpu_custom_call.1} parent=1 // loop_pre_header
      _
    $region3: #{tpu_custom_call.1} parent=1 // loop_header
      %s15 = sphi 0, %s19
      %p16 = scmp.ge.s32.totalorder %s15, 4
      %s22 = sphi 0, %s34
      %s23 = sphi 0, %s30
      %s24 = sphi 0, %s22
      %s25 = sphi 0, %s23
      %s26 = sphi 0, %s24
      %s27 = sphi 0, %s25
      %s35 = sphi 0, %s35
      %s37 = sphi 0, %s35
      %s38 = sphi 0, %s37
      %s52 = sphi 0, %s38
      %s56 = sphi 0, %s56
      %s58 = sphi 0, %s56
      %s59 = sphi 0, %s58
      %s73 = sphi 0, %s59
      %s81 = sphi 0, %s83
      %s84 = sphi 0, %s81
      %s85 = sphi 0, %s84
      %s101 = sphi 0, %s85
      %s109 = sphi 0, %s111
      %s112 = sphi 0, %s109
      %s113 = sphi 0, %s112
      %s129 = sphi 0, %s113
    $region4: #{tpu_custom_call.1} parent=1 // loop_header_branch
      %18 = sbr.rel (%p16) target = $region8
    $region5: #{tpu_custom_call.1} parent=1 // loop_body
      %s20 = ssub.s32 %s15, 1
      %s21 = ssub.s32 %s15, 2
      %s28 = sadd.s32 1, %s23
      %p29 = scmp.ge.s32.totalorder %s28, 1
      %s30 = scalar_select %p29, 0, %s28
      %s31 = sadd.s32 1, %s22
      %s32 = scalar_select %p29, %s31, %s22
      %p33 = scmp.ge.s32.totalorder %s32, 2
      %s34 = scalar_select %p33, 0, %s32
      %s36 = sadd.s32 %s35, 1
      %p39 = scmp.eq.s32.totalorder %s15, 1
      %p40 = scmp.ne.s32.totalorder %s35, %s37
      %p41 = scmp.eq.s32.totalorder %s15, 0
      %p42 = por %p40, %p41
      %p43 = scmp.ne.s32.totalorder %s35, %s37
      %p44 = scmp.eq.s32.totalorder %s20, 1
      %p45 = por %p43, %p44
      %p46 = scmp.ne.s32.totalorder %s37, %s38
      %p47 = scmp.eq.s32.totalorder %s20, 0
      %p48 = por %p46, %p47
      %p49 = scmp.ne.s32.totalorder %s37, %s38
      %p50 = scmp.eq.s32.totalorder %s21, 1
      %p51 = por %p49, %p50
      %p53 = scmp.ne.s32.totalorder %s38, %s52
      %p54 = scmp.eq.s32.totalorder %s21, 0
      %p55 = por %p53, %p54
      %s57 = sadd.s32 %s56, 1
      %p60 = scmp.eq.s32.totalorder %s15, 1
      %p61 = scmp.ne.s32.totalorder %s56, %s58
      %p62 = scmp.eq.s32.totalorder %s15, 0
      %p63 = por %p61, %p62
      %p64 = scmp.ne.s32.totalorder %s56, %s58
      %p65 = scmp.eq.s32.totalorder %s20, 1
      %p66 = por %p64, %p65
      %p67 = scmp.ne.s32.totalorder %s58, %s59
      %p68 = scmp.eq.s32.totalorder %s20, 0
      %p69 = por %p67, %p68
      %p70 = scmp.ne.s32.totalorder %s58, %s59
      %p71 = scmp.eq.s32.totalorder %s21, 1
      %p72 = por %p70, %p71
      %p74 = scmp.ne.s32.totalorder %s59, %s73
      %p75 = scmp.eq.s32.totalorder %s21, 0
      %p76 = por %p74, %p75
      %s77 = ssub.s32 %s22, %s34
      %s78 = ssub.s32 %s23, %s30
      %s79 = sor.u32 %s77, %s78
      %p80 = scmp.eq.s32.totalorder %s79, 0
      %s82 = sadd.s32 %s81, 1
      %s83 = scalar_select %p80, %s81, %s82
      %p86 = pneg %p80
      %p87 = scmp.eq.s32.totalorder %s15, 1
      %p88 = por %p86, %p87
      %p89 = scmp.ne.s32.totalorder %s81, %s84
      %p90 = scmp.eq.s32.totalorder %s15, 0
      %p91 = por %p89, %p90
      %p92 = scmp.ne.s32.totalorder %s81, %s84
      %p93 = scmp.eq.s32.totalorder %s20, 1
      %p94 = por %p92, %p93
      %p95 = scmp.ne.s32.totalorder %s84, %s85
      %p96 = scmp.eq.s32.totalorder %s20, 0
      %p97 = por %p95, %p96
      %p98 = scmp.ne.s32.totalorder %s84, %s85
      %p99 = scmp.eq.s32.totalorder %s21, 1
      %p100 = por %p98, %p99
      %p102 = scmp.ne.s32.totalorder %s85, %s101
      %p103 = scmp.eq.s32.totalorder %s21, 0
      %p104 = por %p102, %p103
      %s105 = ssub.s32 %s22, %s34
      %s106 = ssub.s32 %s23, %s30
      %s107 = sor.u32 %s105, %s106
      %p108 = scmp.eq.s32.totalorder %s107, 0
      %s110 = sadd.s32 %s109, 1
      %s111 = scalar_select %p108, %s109, %s110
      %p114 = pneg %p108
      %p115 = scmp.eq.s32.totalorder %s15, 1
      %p116 = por %p114, %p115
      %p117 = scmp.ne.s32.totalorder %s109, %s112
      %p118 = scmp.eq.s32.totalorder %s15, 0
      %p119 = por %p117, %p118
      %p120 = scmp.ne.s32.totalorder %s109, %s112
      %p121 = scmp.eq.s32.totalorder %s20, 1
      %p122 = por %p120, %p121
      %p123 = scmp.ne.s32.totalorder %s112, %s113
      %p124 = scmp.eq.s32.totalorder %s20, 0
      %p125 = por %p123, %p124
      %p126 = scmp.ne.s32.totalorder %s112, %s113
      %p127 = scmp.eq.s32.totalorder %s21, 1
      %p128 = por %p126, %p127
      %p130 = scmp.ne.s32.totalorder %s113, %s129
      %p131 = scmp.eq.s32.totalorder %s21, 0
      %p132 = por %p130, %p131
      %p133 = scmp.le.s32.totalorder 1, %s15
      %p134 = scmp.lt.s32.totalorder %s15, 3
      %p135 = pnand %p133, %p134
      %p136 = pneg %p135
      // Predicated region
      $region9: #{tpu_custom_call.1} parent=5 // pred_check
        _
      $region10: #{tpu_custom_call.1} parent=5 // pred_check_branch
        %138 = sbr.rel (%p135) target = $region12
      $region11: #{tpu_custom_call.1} parent=5 // pred_region
        %s139 = ssub.s32 %s15, 1
        // Predicated region
        $region13: #{tpu_custom_call.1} parent=11 // pred_check
          %p140 = pneg %p48
        $region14: #{tpu_custom_call.1} parent=11 // pred_check_branch
          %142 = sbr.rel (%p140) target = $region16
        $region15: #{tpu_custom_call.1} parent=11 // pred_region
          _
        $region16: #{tpu_custom_call.1} parent=11 // pred_fallthru
          _
        // Predicated region
        $region17: #{tpu_custom_call.1} parent=11 // pred_check
          %p143 = pneg %p69
        $region18: #{tpu_custom_call.1} parent=11 // pred_check_branch
          %145 = sbr.rel (%p143) target = $region20
        $region19: #{tpu_custom_call.1} parent=11 // pred_region
          _
        $region20: #{tpu_custom_call.1} parent=11 // pred_fallthru
          _
      $region12: #{tpu_custom_call.1} parent=5 // pred_fallthru
        _
      %p146 = scmp.lt.s32.totalorder %s15, 2
      // Predicated region
      $region21: #{tpu_custom_call.1} parent=5 // pred_check
        %p147 = pneg %p146
      $region22: #{tpu_custom_call.1} parent=5 // pred_check_branch
        %149 = sbr.rel (%p147) target = $region24
      $region23: #{tpu_custom_call.1} parent=5 // pred_region
        // Predicated region
        $region25: #{tpu_custom_call.1} parent=23 // pred_check
          %p150 = pneg %p91
        $region26: #{tpu_custom_call.1} parent=23 // pred_check_branch
          %152 = sbr.rel (%p150) target = $region28
        $region27: #{tpu_custom_call.1} parent=23 // pred_region
          %s153 = sand.u32 %s81, 1
          %s154 = scalar_lea.sflag [#allocation3], %s153
          %s155 = sand.u32 %s81, 1
          %s156 = smul.addr %s155, 64
          %s157 = scalar_lea.vmem [#allocation2], %s156
          %s158 = smul.u32 2, %s23
          %160 = vsyncadd %s154, 0
          %s161 = smul.addr %s22, 8
          %s162 = sadd.s32 %s158, %s161
          %s163 = smul.addr %s162, 8
          %s164 = scalar_lea.hbm %s2, %s163
          %s165 = sshll.u32 %s164, 4
          %s166 = int_to_ptr.hbm [resolvable:$true] %s165
          %s167 = sshll.u32 %s157, 4
          %s168 = int_to_ptr.vmem [resolvable:$true] %s167
          %173 = dma.hbm_to_vmem [thread:$0]  %s166, 1024, %s168, %s154, 256, 256, 16
        $region28: #{tpu_custom_call.1} parent=23 // pred_fallthru
          _
      $region24: #{tpu_custom_call.1} parent=5 // pred_fallthru
        _
      %p174 = scmp.le.s32.totalorder 1, %s15
      %p175 = scmp.lt.s32.totalorder %s15, 3
      %p176 = pnand %p174, %p175
      %p177 = pneg %p176
      // Predicated region
      $region29: #{tpu_custom_call.1} parent=5 // pred_check
        _
      $region30: #{tpu_custom_call.1} parent=5 // pred_check_branch
        %179 = sbr.rel (%p176) target = $region32
      $region31: #{tpu_custom_call.1} parent=5 // pred_region
        %s180 = ssub.s32 %s15, 1
        %s181 = sand.u32 %s84, 1
        %s182 = scalar_lea.sflag [#allocation3], %s181
        %s183 = sand.u32 %s84, 1
        %s184 = smul.addr %s183, 64
        %s185 = scalar_lea.vmem [#allocation2], %s184
        // Predicated region
        $region33: #{tpu_custom_call.1} parent=31 // pred_check
          %p186 = pneg %p97
        $region34: #{tpu_custom_call.1} parent=31 // pred_check_branch
          %188 = sbr.rel (%p186) target = $region36
        $region35: #{tpu_custom_call.1} parent=31 // pred_region
          %190 = dma.done %s182, 1024
        $region36: #{tpu_custom_call.1} parent=31 // pred_fallthru
          _
        %p191 = pneg %p48
        %p192 = pneg %p45
        %p193 = pneg %p69
        %p194 = pneg %p66
        %s195 = sand.u32 %s84, 1
        %s196 = scalar_lea.sflag [#allocation3], %s195
        %s197 = sand.u32 %s84, 1
        %s198 = smul.addr %s197, 64
        %s199 = scalar_lea.vmem [#allocation2], %s198
        %p200 = pneg %p97
        %p201 = pneg %p94
        %p202 = pneg %p125
        %p203 = pneg %p122
        %s204 = sand.u32 %s112, 1
        %s205 = scalar_lea.sflag [#allocation4], %s204
        %s206 = sand.u32 %s112, 1
        %s207 = smul.addr %s206, 8
        %s208 = scalar_lea.vmem [#allocation5], %s207
        %s209 = smul.u32 2, %s25
        %s210 = smul.u32 2, %s25
        %v211 = vld [vmem:[%s0] sm:$0xf]
        %v212 = vld [vmem:[%s185] sm:$0xff]
        %v213 = vld [vmem:[%s185 + $0x8] sm:$0xff]
        %v214 = vld [vmem:[%s185 + $0x10] sm:$0xff]
        %v215 = vld [vmem:[%s185 + $0x18] sm:$0xff]
        %v216 = vld [vmem:[%s185 + $0x20] sm:$0xff]
        %v217 = vld [vmem:[%s185 + $0x28] sm:$0xff]
        %v218 = vld [vmem:[%s185 + $0x30] sm:$0xff]
        %v219 = vld [vmem:[%s185 + $0x38] sm:$0xff]
        %v220 = vld [vmem:[%s1] sm:$0xf]
        %222 = vset.pattern.permute.xlu0 0
        %223 = vperm.xlu0 %222, %v220
        %v224 = vpop.permute.xlu0 %223
        %vm226 = vcmask 261120
        %v228 = vsel %vm226, %v211, 0
        %230 = vmatpush.msra.mxu0 0.0
        %231 = vmatpush.msra.mxu0 0.0
        %232 = vmatpush.msra.mxu0 0.0
        %233 = vmatpush.msra.mxu0 0.0
        %234 = vmatpush.msra.mxu0 0.0
        %235 = vmatpush.msra.mxu0 0.0
        %236 = vmatpush.msra.mxu0 0.0
        %237 = vmatpush.msra.mxu0 0.0
        %238 = vmatpush.msra.mxu0 0.0
        %239 = vmatpush.msra.mxu0 0.0
        %240 = vmatpush.msra.mxu0 0.0
        %241 = vmatpush.msra.mxu0 0.0
        %242 = vmatpush.msra.mxu0 %v218
        %243 = vmatpush.msra.mxu0 %v216
        %244 = vmatpush.msra.mxu0 %v214
        %245 = vmatpush.msra.mxu0 %v212
        %246 = vmatmul.f32.gmra.mxu0 %v228
        %v247 = vpop.f32.mrf.mxu0
        %v248 = vadd.f32 %v224, %v247
        %249 = vdwg.mxu0
        %250 = vmatpush.msra.mxu0 0.0
        %251 = vmatpush.msra.mxu0 0.0
        %252 = vmatpush.msra.mxu0 0.0
        %253 = vmatpush.msra.mxu0 0.0
        %254 = vmatpush.msra.mxu0 0.0
        %255 = vmatpush.msra.mxu0 0.0
        %256 = vmatpush.msra.mxu0 0.0
        %257 = vmatpush.msra.mxu0 0.0
        %258 = vmatpush.msra.mxu0 0.0
        %259 = vmatpush.msra.mxu0 0.0
        %260 = vmatpush.msra.mxu0 0.0
        %261 = vmatpush.msra.mxu0 0.0
        %262 = vmatpush.msra.mxu0 %v219
        %263 = vmatpush.msra.mxu0 %v217
        %264 = vmatpush.msra.mxu0 %v215
        %265 = vmatpush.msra.mxu0 %v213
        %266 = vmatmul.f32.gmra.mxu0 %v228
        %v267 = vpop.f32.mrf.mxu0
        %v268 = vadd.f32 %v224, %v267
        %269 = vdwg.mxu0
        %v272 = vrot.slane %v268, 4
        %vm273 = vcmask 1043456
        %v274 = vsel %vm273, %v248, %v272
        %276 = vst [vmem:[%s208] sm:$0xff] %v274
        %s277 = sand.u32 %s112, 1
        %s278 = scalar_lea.sflag [#allocation4], %s277
        %s279 = sand.u32 %s112, 1
        %s280 = smul.addr %s279, 8
        %s281 = scalar_lea.vmem [#allocation5], %s280
        // Predicated region
        $region37: #{tpu_custom_call.1} parent=31 // pred_check
          %p282 = pneg %p122
        $region38: #{tpu_custom_call.1} parent=31 // pred_check_branch
          %284 = sbr.rel (%p282) target = $region40
        $region39: #{tpu_custom_call.1} parent=31 // pred_region
          %s285 = smul.u32 2, %s25
          %287 = vsyncadd %s278, 0
          %s288 = smul.addr %s24, 2
          %s289 = sadd.s32 %s285, %s288
          %s290 = smul.addr %s289, 4
          %s291 = scalar_lea.hbm %s3, %s290
          %s293 = sshll.u32 %s281, 4
          %s294 = int_to_ptr.vmem [resolvable:$true] %s293
          %s295 = sshll.u32 %s291, 4
          %s296 = int_to_ptr.hbm [resolvable:$true] %s295
          %298 = dma.vmem_to_hbm [thread:$0]  %s294, 128, %s296, %s278
        $region40: #{tpu_custom_call.1} parent=31 // pred_fallthru
          _
      $region32: #{tpu_custom_call.1} parent=5 // pred_fallthru
        _
      %p299 = scmp.le.s32.totalorder 2, %s15
      // Predicated region
      $region41: #{tpu_custom_call.1} parent=5 // pred_check
        %p300 = pneg %p299
      $region42: #{tpu_custom_call.1} parent=5 // pred_check_branch
        %302 = sbr.rel (%p300) target = $region44
      $region43: #{tpu_custom_call.1} parent=5 // pred_region
        %s303 = ssub.s32 %s15, 2
        // Predicated region
        $region45: #{tpu_custom_call.1} parent=43 // pred_check
          %p304 = pneg %p128
        $region46: #{tpu_custom_call.1} parent=43 // pred_check_branch
          %306 = sbr.rel (%p304) target = $region48
        $region47: #{tpu_custom_call.1} parent=43 // pred_region
          %s307 = sand.u32 %s113, 1
          %s308 = scalar_lea.sflag [#allocation4], %s307
          %s309 = sand.u32 %s113, 1
          %s310 = smul.addr %s309, 8
          %s311 = scalar_lea.vmem [#allocation5], %s310
          %313 = dma.done %s308, 128
        $region48: #{tpu_custom_call.1} parent=43 // pred_fallthru
          _
      $region44: #{tpu_custom_call.1} parent=5 // pred_fallthru
        _
    $region6: #{tpu_custom_call.1} parent=1 // loop_footer
      %s19 = sadd.s32 1, %s15
    $region7: #{tpu_custom_call.1} parent=1 // loop_footer_branch
      %14 = sbr.rel target = $region3
    $region8: #{tpu_custom_call.1} parent=1 // loop_exit
      _
    %314 = vsyncpa [#allocation3], 1
    %s315 = scalar_lea.sflag [#allocation3], 1
    %316 = vsyncpa %s315, 1
    %317 = vsyncpa [#allocation4], 1
    %s318 = scalar_lea.sflag [#allocation4], 1
    %319 = vsyncpa %s318, 1

</llo_original>
